<compile_context>
chip_gen: v6e
topology: v6e:2x2x1
jax: 0.10.0
libtpu: 0.0.40
codegen_flags: <defaults>
</compile_context>

<pallas_src>
import numpy as np
import jax
import jax.numpy as jnp
from jax.experimental import pallas as pl
from jax.experimental.pallas import tpu as pltpu


def _round_up(x, m):
    return (x + m - 1) // m * m


# ---------------------------------------------------------------------------
# Pallas kernel: tiled (M, K) @ (K, Cout) with fused BN / residual / ReLU
# ---------------------------------------------------------------------------
def _make_conv_bn_kernel(relu, has_residual):
    def kernel(*refs):
        if has_residual:
            x_ref, w_ref, s_ref, b_ref, r_ref, o_ref, acc_ref = refs
        else:
            x_ref, w_ref, s_ref, b_ref, o_ref, acc_ref = refs
            r_ref = None
        k = pl.program_id(2)

        @pl.when(k == 0)
        def _init():
            acc_ref[...] = jnp.zeros_like(acc_ref)

        # (tm, Cin_pad) bf16 @ (Cin_pad, tn) bf16 -> f32 on the MXU.
        acc_ref[...] += jnp.dot(x_ref[0], w_ref[0],
                                preferred_element_type=jnp.float32)

        @pl.when(k == pl.num_programs(2) - 1)
        def _finalize():
            y = acc_ref[...] * s_ref[...] + b_ref[...]   # f32 epilogue
            if has_residual:
                y = y + r_ref[...]
            if relu:
                y = jnp.maximum(y, 0.0)
            o_ref[...] = y.astype(o_ref.dtype)

    return kernel


# ---------------------------------------------------------------------------
# JAX glue: per-tap patch extraction (kept as (taps, M, Cin), contracted per-tap)
# ---------------------------------------------------------------------------
def _im2col_taps(x, kh, kw, stride, pad):
    # x: (N, H, W, C) -> taps (kh*kw, N*Ho*Wo, C)
    n, h, w, c = x.shape
    ho = (h + 2 * pad - kh) // stride + 1
    wo = (w + 2 * pad - kw) // stride + 1
    xp = jnp.pad(x, ((0, 0), (pad, pad), (pad, pad), (0, 0))) if pad else x
    taps = []
    for i in range(kh):
        for j in range(kw):
            t = jax.lax.slice(
                xp,
                (0, i, j, 0),
                (n, i + (ho - 1) * stride + 1, j + (wo - 1) * stride + 1, c),
                (1, stride, stride, 1))
            taps.append(t.reshape(n * ho * wo, c))
    return jnp.stack(taps, axis=0), ho, wo


def conv_bn_act(x, w, scale, bias, *, stride, pad, relu=True, residual=None,
                tn=128):
    """Fused conv(kh x kw) + inference-BN (+ residual) (+ ReLU).

    x: (N, H, W, Cin) f32; w: (kh, kw, Cin, Cout); scale/bias: (Cout,) f32.
    residual: optional (N, Ho, Wo, Cout) f32, added before the final ReLU.
    Returns (N, Ho, Wo, Cout) f32.
    """
    n = x.shape[0]
    kh, kw, cin, cout = w.shape
    taps, ho, wo = _im2col_taps(x, kh, kw, stride, pad)      # (KT, M, Cin)
    kt, m, _ = taps.shape

    cin_p = _round_up(cin, 128)
    cout_p = _round_up(cout, tn)
    tm = min(512, _round_up(m, 128))
    m_p = _round_up(m, tm)

    # bf16 matmul inputs, lane-dense channel padding.
    taps_p = jnp.pad(taps, ((0, 0), (0, m_p - m), (0, cin_p - cin))
                     ).astype(jnp.bfloat16)
    w_p = jnp.pad(w.reshape(kh * kw, cin, cout),
                  ((0, 0), (0, cin_p - cin), (0, cout_p - cout))
                  ).astype(jnp.bfloat16)
    s_p = jnp.pad(scale.reshape(1, cout).astype(jnp.float32),
                  ((0, 0), (0, cout_p - cout)))
    b_p = jnp.pad(bias.reshape(1, cout).astype(jnp.float32),
                  ((0, 0), (0, cout_p - cout)))

    args = [taps_p, w_p, s_p, b_p]
    in_specs = [
        pl.BlockSpec((1, tm, cin_p), lambda i, j, k: (k, i, 0)),
        pl.BlockSpec((1, cin_p, tn), lambda i, j, k: (k, 0, j)),
        pl.BlockSpec((1, tn), lambda i, j, k: (0, j)),
        pl.BlockSpec((1, tn), lambda i, j, k: (0, j)),
    ]
    has_res = residual is not None
    if has_res:
        r = residual.reshape(-1, cout).astype(jnp.float32)
        r = jnp.pad(r, ((0, m_p - m), (0, cout_p - cout)))
        args.append(r)
        in_specs.append(pl.BlockSpec((tm, tn), lambda i, j, k: (i, j)))

    out = pl.pallas_call(
        _make_conv_bn_kernel(relu, has_res),
        out_shape=jax.ShapeDtypeStruct((m_p, cout_p), jnp.float32),
        grid_spec=pltpu.PrefetchScalarGridSpec(
            num_scalar_prefetch=0,
            grid=(m_p // tm, cout_p // tn, kt),
            in_specs=in_specs,
            out_specs=pl.BlockSpec((tm, tn), lambda i, j, k: (i, j)),
            scratch_shapes=[pltpu.VMEM((tm, tn), jnp.float32)]),
        compiler_params=pltpu.CompilerParams(
            dimension_semantics=("parallel", "parallel", "arbitrary"),
            vmem_limit_bytes=32 * 1024 * 1024),
    )(*args)

    return out[:m, :cout].reshape(n, ho, wo, cout)


# ---------------------------------------------------------------------------
# Parameters (deterministic, synthetic; BN folded to inference scale/bias)
# ---------------------------------------------------------------------------
def _init_conv(key, kh, kw, cin, cout):
    fan_in = kh * kw * cin
    return (jax.random.normal(key, (kh, kw, cin, cout), jnp.float32)
            / np.sqrt(fan_in))


def _init_bn(key, c, eps=1e-5):
    k1, k2, k3, k4 = jax.random.split(key, 4)
    gamma = 1.0 + 0.1 * jax.random.normal(k1, (c,), jnp.float32)
    beta = 0.1 * jax.random.normal(k2, (c,), jnp.float32)
    mean = 0.1 * jax.random.normal(k3, (c,), jnp.float32)
    var = 1.0 + 0.5 * jax.random.uniform(k4, (c,), jnp.float32)
    scale = gamma / jnp.sqrt(var + eps)       # fold inference-mode BN
    bias = beta - mean * scale
    return scale, bias


def init_conv_block_params(key, in_channels, out_channels, stride=1):
    key, k1, k2, k3, k4, k5, k6 = jax.random.split(key, 7)
    p = {"stride": stride,
         "w1": _init_conv(k1, 3, 3, in_channels, out_channels)}
    p["s1"], p["b1"] = _init_bn(k2, out_channels)
    p["w2"] = _init_conv(k3, 3, 3, out_channels, out_channels)
    p["s2"], p["b2"] = _init_bn(k4, out_channels)
    if stride != 1 or in_channels != out_channels:
        p["wd"] = _init_conv(k5, 1, 1, in_channels, out_channels)
        p["sd"], p["bd"] = _init_bn(k6, out_channels)
    return p


# ---------------------------------------------------------------------------
# ConvBlock forward (matches the PyTorch module semantics)
# ---------------------------------------------------------------------------
def conv_block_forward(x_nchw, p):
    x = jnp.transpose(x_nchw, (0, 2, 3, 1)).astype(jnp.float32)   # NCHW -> NHWC
    identity = x
    out = conv_bn_act(x, p["w1"], p["s1"], p["b1"],
                      stride=p["stride"], pad=1, relu=True)
    if "wd" in p:
        identity = conv_bn_act(x, p["wd"], p["sd"], p["bd"],
                               stride=p["stride"], pad=0, relu=False)
    # conv2 + bn2 + residual add + relu fused in one kernel epilogue.
    out = conv_bn_act(out, p["w2"], p["s2"], p["b2"],
                      stride=1, pad=1, relu=True, residual=identity)
    return jnp.transpose(out, (0, 3, 1, 2))                       # NHWC -> NCHW


# ---------------------------------------------------------------------------
# Plain-JAX reference (for a loose correctness check; f32 everywhere)
# ---------------------------------------------------------------------------
def _ref_conv_block(x_nchw, p):
    x = jnp.transpose(x_nchw, (0, 2, 3, 1)).astype(jnp.float32)

    def conv(x_, w, stride, pad):
        return jax.lax.conv_general_dilated(
            x_, w, window_strides=(stride, stride),
            padding=((pad, pad), (pad, pad)),
            dimension_numbers=("NHWC", "HWIO", "NHWC"))

    out = conv(x, p["w1"], p["stride"], 1) * p["s1"] + p["b1"]
    out = jnp.maximum(out, 0.0)
    identity = x
    if "wd" in p:
        identity = conv(x, p["wd"], p["stride"], 0) * p["sd"] + p["bd"]
    out = conv(out, p["w2"], 1, 1) * p["s2"] + p["b2"] + identity
    out = jnp.maximum(out, 0.0)
    return jnp.transpose(out, (0, 3, 1, 2))


# ---------------------------------------------------------------------------
if __name__ == "__main__":
    key = jax.random.PRNGKey(0)
    k_pa, k_pb, k_xa, k_xb = jax.random.split(key, 4)

    # Case A: stride-2 ConvBlock with downsample (1x1 conv + BN identity path).
    pa = init_conv_block_params(k_pa, in_channels=32, out_channels=64, stride=2)
    xa = jax.random.normal(k_xa, (2, 32, 16, 16), jnp.float32)    # NCHW
    ya = jax.block_until_ready(conv_block_forward(xa, pa))
    assert ya.shape == (2, 64, 8, 8), ya.shape
    assert bool(jnp.all(jnp.isfinite(ya))), "non-finite output (case A)"

    # Case B: stride-1 ConvBlock, plain identity residual (no downsample).
    pb = init_conv_block_params(k_pb, in_channels=64, out_channels=64, stride=1)
    xb = jax.random.normal(k_xb, (2, 64, 16, 16), jnp.float32)
    yb = jax.block_until_ready(conv_block_forward(xb, pb))
    assert yb.shape == (2, 64, 16, 16), yb.shape
    assert bool(jnp.all(jnp.isfinite(yb))), "non-finite output (case B)"

    # Loose tolerance: matmul inputs are bf16 on the MXU, epilogue in f32.
    ra = _ref_conv_block(xa, pa)
    rb = _ref_conv_block(xb, pb)
    err = max(float(jnp.max(jnp.abs(ya - ra))),
              float(jnp.max(jnp.abs(yb - rb))))
    assert err < 2e-1, f"max abs err vs reference too large: {err}"

    print("KERNEL_OK")
</pallas_src>

<mosaic_0001>
module attributes {stable_mosaic.version = 11 : i64} {
  func.func @kernel(%arg0: i32, %arg1: i32, %arg2: i32, %arg3: memref<1x128x128xbf16, #tpu.memory_space<vmem>>, %arg4: memref<1x128x128xbf16, #tpu.memory_space<vmem>>, %arg5: memref<1x128xf32, #tpu.memory_space<vmem>>, %arg6: memref<1x128xf32, #tpu.memory_space<vmem>>, %arg7: memref<128x128xf32, #tpu.memory_space<vmem>>, %arg8: memref<128x128xf32, #tpu.memory_space<vmem>>) attributes {dimension_semantics = [#tpu.dimension_semantics<parallel>, #tpu.dimension_semantics<parallel>, #tpu.dimension_semantics<arbitrary>], iteration_bounds = array<i64: 1, 1, 9>, scalar_prefetch = 0 : i64, scratch_operands = 1 : i64, tpu.core_type = #tpu.core_type<tc>, window_params = [{transform_indices = @transform_0, window_bounds = array<i64: 1, 128, 128>}, {transform_indices = @transform_1, window_bounds = array<i64: 1, 128, 128>}, {transform_indices = @transform_2, window_bounds = array<i64: 1, 128>}, {transform_indices = @transform_3, window_bounds = array<i64: 1, 128>}, {transform_indices = @transform_4, window_bounds = array<i64: 128, 128>}]} {
    %c0_i32 = arith.constant 0 : i32
    %0 = arith.cmpi eq, %arg2, %c0_i32 : i32
    %1 = arith.extui %0 : i1 to i32
    %c0_i32_0 = arith.constant 0 : i32
    %2 = arith.cmpi ne, %1, %c0_i32_0 : i32
    scf.if %2 {
      %cst_11 = arith.constant 0.000000e+00 : f32
      %14 = vector.broadcast %cst_11 : f32 to vector<128x128xf32>
      %c0_12 = arith.constant 0 : index
      %c0_13 = arith.constant 0 : index
      %15 = vector.load %arg8[%c0_12, %c0_13] : memref<128x128xf32, #tpu.memory_space<vmem>>, vector<128x128xf32>
      tpu.vector_store %arg8[%c0_12, %c0_13], %14 {strides = array<i32>} : memref<128x128xf32, #tpu.memory_space<vmem>>, vector<128x128xf32>,
    } else {
    }
    %c0 = arith.constant 0 : index
    %c0_1 = arith.constant 0 : index
    %3 = vector.load %arg8[%c0, %c0_1] : memref<128x128xf32, #tpu.memory_space<vmem>>, vector<128x128xf32>
    %c0_2 = arith.constant 0 : index
    %c0_3 = arith.constant 0 : index
    %c0_4 = arith.constant 0 : index
    %4 = vector.load %arg3[%c0_2, %c0_3, %c0_4] : memref<1x128x128xbf16, #tpu.memory_space<vmem>>, vector<1x128x128xbf16>
    %5 = vector.shape_cast %4 : vector<1x128x128xbf16> to vector<128x128xbf16>
    %c0_5 = arith.constant 0 : index
    %c0_6 = arith.constant 0 : index
    %c0_7 = arith.constant 0 : index
    %6 = vector.load %arg4[%c0_5, %c0_6, %c0_7] : memref<1x128x128xbf16, #tpu.memory_space<vmem>>, vector<1x128x128xbf16>
    %7 = vector.shape_cast %6 : vector<1x128x128xbf16> to vector<128x128xbf16>
    %cst = arith.constant dense<0.000000e+00> : vector<128x128xf32>
    %8 = tpu.matmul %5, %7, %cst {dimension_numbers = #tpu.dot_dimension_numbers<[1], [0], [0], [1], [0, 0, 1, 1], [], []>} : vector<128x128xbf16>, vector<128x128xbf16>, vector<128x128xf32> -> vector<128x128xf32>
    %9 = arith.addf %3, %8 : vector<128x128xf32>
    %c0_8 = arith.constant 0 : index
    %c0_9 = arith.constant 0 : index
    %10 = vector.load %arg8[%c0_8, %c0_9] : memref<128x128xf32, #tpu.memory_space<vmem>>, vector<128x128xf32>
    tpu.vector_store %arg8[%c0_8, %c0_9], %9 {strides = array<i32>} : memref<128x128xf32, #tpu.memory_space<vmem>>, vector<128x128xf32>,
    %c8_i32 = arith.constant 8 : i32
    %11 = arith.cmpi eq, %arg2, %c8_i32 : i32
    %12 = arith.extui %11 : i1 to i32
    %c0_i32_10 = arith.constant 0 : i32
    %13 = arith.cmpi ne, %12, %c0_i32_10 : i32
    scf.if %13 {
      %c0_11 = arith.constant 0 : index
      %c0_12 = arith.constant 0 : index
      %14 = vector.load %arg8[%c0_11, %c0_12] : memref<128x128xf32, #tpu.memory_space<vmem>>, vector<128x128xf32>
      %c0_13 = arith.constant 0 : index
      %c0_14 = arith.constant 0 : index
      %15 = vector.load %arg5[%c0_13, %c0_14] : memref<1x128xf32, #tpu.memory_space<vmem>>, vector<1x128xf32>
      %16 = vector.broadcast %15 : vector<1x128xf32> to vector<128x128xf32>
      %17 = arith.mulf %14, %16 : vector<128x128xf32>
      %c0_15 = arith.constant 0 : index
      %c0_16 = arith.constant 0 : index
      %18 = vector.load %arg6[%c0_15, %c0_16] : memref<1x128xf32, #tpu.memory_space<vmem>>, vector<1x128xf32>
      %19 = vector.broadcast %18 : vector<1x128xf32> to vector<128x128xf32>
      %20 = arith.addf %17, %19 : vector<128x128xf32>
      %cst_17 = arith.constant 0.000000e+00 : f32
      %21 = vector.broadcast %cst_17 : f32 to vector<128x128xf32>
      %22 = arith.maximumf %20, %21 : vector<128x128xf32>
      %c0_18 = arith.constant 0 : index
      %c0_19 = arith.constant 0 : index
      %23 = vector.load %arg7[%c0_18, %c0_19] : memref<128x128xf32, #tpu.memory_space<vmem>>, vector<128x128xf32>
      tpu.vector_store %arg7[%c0_18, %c0_19], %22 {strides = array<i32>} : memref<128x128xf32, #tpu.memory_space<vmem>>, vector<128x128xf32>,
    } else {
    }
    return
  }
  func.func @transform_0(%arg0: i32, %arg1: i32, %arg2: i32) -> (i32, i32, i32) {
    %c0_i32 = arith.constant 0 : i32
    %c0_i32_0 = arith.constant 0 : i32
    return %arg2, %arg0, %c0_i32 : i32, i32, i32
  }
  func.func @transform_1(%arg0: i32, %arg1: i32, %arg2: i32) -> (i32, i32, i32) {
    %c0_i32 = arith.constant 0 : i32
    %c0_i32_0 = arith.constant 0 : i32
    return %arg2, %c0_i32, %arg1 : i32, i32, i32
  }
  func.func @transform_2(%arg0: i32, %arg1: i32, %arg2: i32) -> (i32, i32) {
    %c0_i32 = arith.constant 0 : i32
    %c0_i32_0 = arith.constant 0 : i32
    return %c0_i32, %arg1 : i32, i32
  }
  func.func @transform_3(%arg0: i32, %arg1: i32, %arg2: i32) -> (i32, i32) {
    %c0_i32 = arith.constant 0 : i32
    %c0_i32_0 = arith.constant 0 : i32
    return %c0_i32, %arg1 : i32, i32
  }
  func.func @transform_4(%arg0: i32, %arg1: i32, %arg2: i32) -> (i32, i32) {
    %c0_i32 = arith.constant 0 : i32
    return %arg0, %arg1 : i32, i32
  }
}

</mosaic_0001>

<llo_original>
// kernel: tpu_custom_call.1
$region0: #{tpu_custom_call.1}
  #allocation0 [shape = 'u32[]', space=smem, size = 0x4, offset = 0x4, fixed_abs, tag = 'smem constant byte address 0x4 - core index']
  #allocation1 [shape = 'u32[144,128]{1,0:T(1,128)}', space=vmem, size = 0x12000, scoped, tag = 'internal scratch']
  #allocation2 [shape = 'f32[128,128]{1,0:T(8,128)}', space=vmem, size = 0x10000, scoped, tag = 'scratch operand']
  %s0 = inlined_call_operand.hbm [shape: bf16[9,128,128], index: 0, kind: input, shape index: {}]
  %s1 = inlined_call_operand.hbm [shape: bf16[9,128,128], index: 1, kind: input, shape index: {}]
  %s2 = inlined_call_operand.vmem [shape: f32[1,128], index: 2, kind: input, shape index: {}]
  %s3 = inlined_call_operand.vmem [shape: f32[1,128], index: 3, kind: input, shape index: {}]
  %s4 = inlined_call_operand.hbm [shape: f32[128,128], index: 4, kind: output, shape index: {}]
  %s5 = sld [smem:[#allocation0]]
  $region65: #{tpu_custom_call.1} parent=0
    _
  %s7 = ssub.s32 1, %s5
  %s8 = scalar_select 0, %s7, %s5
  $region1: #{tpu_custom_call.1} parent=0
    #allocation3 [shape = 'u8[65536]{0}', space=vmem, size = 0x10000, scoped, tag = 'input window, operand 0']
    #allocation4 [shape = 's32[2]{0}', space=sflag, size = 0x8, scoped, tag = 'scoped memory for tpu_custom_call.1']
    #allocation5 [shape = 's32[2]{0}', space=sflag, size = 0x8, scoped, tag = 'scoped memory for tpu_custom_call.1']
    #allocation6 [shape = 'u8[65536]{0}', space=vmem, size = 0x10000, scoped, tag = 'input window, operand 1']
    #allocation7 [shape = 's32[2]{0}', space=sflag, size = 0x8, scoped, tag = 'scoped memory for tpu_custom_call.1']
    #allocation8 [shape = 'u8[65536]{0}', space=vmem, size = 0x10000, scoped, tag = 'output window, operand 0, single buffered']
    %9 = vsyncpa [#allocation4], 0
    %s10 = scalar_lea.sflag [#allocation4], 1
    %11 = vsyncpa %s10, 0
    %12 = vsyncpa [#allocation7], 0
    %s13 = scalar_lea.sflag [#allocation7], 1
    %14 = vsyncpa %s13, 0
    %15 = vsyncpa [#allocation5], 0
    loop: start=0, step=1, limit=11
    $region2: #{tpu_custom_call.1} parent=1 // loop_pre_header
      _
    $region3: #{tpu_custom_call.1} parent=1 // loop_header
      %s17 = sphi 0, %s21
      %p18 = scmp.ge.s32.totalorder %s17, 11
      %s24 = sphi 0, %s43
      %s25 = sphi 0, %s39
      %s26 = sphi 0, %s35
      %s27 = sphi 0, %s24
      %s28 = sphi 0, %s25
      %s29 = sphi 0, %s26
      %s30 = sphi 0, %s27
      %s31 = sphi 0, %s28
      %s32 = sphi 0, %s29
      %s48 = sphi 0, %s50
      %s51 = sphi 0, %s48
      %s52 = sphi 0, %s51
      %s68 = sphi 0, %s52
      %s76 = sphi 0, %s78
      %s79 = sphi 0, %s76
      %s80 = sphi 0, %s79
      %s96 = sphi 0, %s80
      %s102 = sphi 0, %s104
      %s105 = sphi 0, %s102
      %s106 = sphi 0, %s105
      %s122 = sphi 0, %s106
      %s128 = sphi 0, %s130
      %s131 = sphi 0, %s128
      %s132 = sphi 0, %s131
      %s148 = sphi 0, %s132
      %s156 = sphi 0, %s158
      %s159 = sphi 0, %s156
      %s160 = sphi 0, %s159
      %s176 = sphi 0, %s160
    $region4: #{tpu_custom_call.1} parent=1 // loop_header_branch
      %20 = sbr.rel (%p18) target = $region8
    $region5: #{tpu_custom_call.1} parent=1 // loop_body
      %s22 = ssub.s32 %s17, 1
      %s23 = ssub.s32 %s17, 2
      %s33 = sadd.s32 1, %s26
      %p34 = scmp.ge.s32.totalorder %s33, 9
      %s35 = scalar_select %p34, 0, %s33
      %s36 = sadd.s32 1, %s25
      %s37 = scalar_select %p34, %s36, %s25
      %p38 = scmp.ge.s32.totalorder %s37, 1
      %s39 = scalar_select %p38, 0, %s37
      %s40 = sadd.s32 1, %s24
      %s41 = scalar_select %p38, %s40, %s24
      %p42 = scmp.ge.s32.totalorder %s41, 1
      %s43 = scalar_select %p42, 0, %s41
      %s44 = ssub.s32 %s26, %s35
      %s45 = ssub.s32 %s24, %s43
      %s46 = sor.u32 %s44, %s45
      %p47 = scmp.eq.s32.totalorder %s46, 0
      %s49 = sadd.s32 %s48, 1
      %s50 = scalar_select %p47, %s48, %s49
      %p53 = pneg %p47
      %p54 = scmp.eq.s32.totalorder %s17, 8
      %p55 = por %p53, %p54
      %p56 = scmp.ne.s32.totalorder %s48, %s51
      %p57 = scmp.eq.s32.totalorder %s17, 0
      %p58 = por %p56, %p57
      %p59 = scmp.ne.s32.totalorder %s48, %s51
      %p60 = scmp.eq.s32.totalorder %s22, 8
      %p61 = por %p59, %p60
      %p62 = scmp.ne.s32.totalorder %s51, %s52
      %p63 = scmp.eq.s32.totalorder %s22, 0
      %p64 = por %p62, %p63
      %p65 = scmp.ne.s32.totalorder %s51, %s52
      %p66 = scmp.eq.s32.totalorder %s23, 8
      %p67 = por %p65, %p66
      %p69 = scmp.ne.s32.totalorder %s52, %s68
      %p70 = scmp.eq.s32.totalorder %s23, 0
      %p71 = por %p69, %p70
      %s72 = ssub.s32 %s26, %s35
      %s73 = ssub.s32 %s25, %s39
      %s74 = sor.u32 %s72, %s73
      %p75 = scmp.eq.s32.totalorder %s74, 0
      %s77 = sadd.s32 %s76, 1
      %s78 = scalar_select %p75, %s76, %s77
      %p81 = pneg %p75
      %p82 = scmp.eq.s32.totalorder %s17, 8
      %p83 = por %p81, %p82
      %p84 = scmp.ne.s32.totalorder %s76, %s79
      %p85 = scmp.eq.s32.totalorder %s17, 0
      %p86 = por %p84, %p85
      %p87 = scmp.ne.s32.totalorder %s76, %s79
      %p88 = scmp.eq.s32.totalorder %s22, 8
      %p89 = por %p87, %p88
      %p90 = scmp.ne.s32.totalorder %s79, %s80
      %p91 = scmp.eq.s32.totalorder %s22, 0
      %p92 = por %p90, %p91
      %p93 = scmp.ne.s32.totalorder %s79, %s80
      %p94 = scmp.eq.s32.totalorder %s23, 8
      %p95 = por %p93, %p94
      %p97 = scmp.ne.s32.totalorder %s80, %s96
      %p98 = scmp.eq.s32.totalorder %s23, 0
      %p99 = por %p97, %p98
      %s100 = ssub.s32 %s25, %s39
      %p101 = scmp.eq.s32.totalorder %s100, 0
      %s103 = sadd.s32 %s102, 1
      %s104 = scalar_select %p101, %s102, %s103
      %p107 = pneg %p101
      %p108 = scmp.eq.s32.totalorder %s17, 8
      %p109 = por %p107, %p108
      %p110 = scmp.ne.s32.totalorder %s102, %s105
      %p111 = scmp.eq.s32.totalorder %s17, 0
      %p112 = por %p110, %p111
      %p113 = scmp.ne.s32.totalorder %s102, %s105
      %p114 = scmp.eq.s32.totalorder %s22, 8
      %p115 = por %p113, %p114
      %p116 = scmp.ne.s32.totalorder %s105, %s106
      %p117 = scmp.eq.s32.totalorder %s22, 0
      %p118 = por %p116, %p117
      %p119 = scmp.ne.s32.totalorder %s105, %s106
      %p120 = scmp.eq.s32.totalorder %s23, 8
      %p121 = por %p119, %p120
      %p123 = scmp.ne.s32.totalorder %s106, %s122
      %p124 = scmp.eq.s32.totalorder %s23, 0
      %p125 = por %p123, %p124
      %s126 = ssub.s32 %s25, %s39
      %p127 = scmp.eq.s32.totalorder %s126, 0
      %s129 = sadd.s32 %s128, 1
      %s130 = scalar_select %p127, %s128, %s129
      %p133 = pneg %p127
      %p134 = scmp.eq.s32.totalorder %s17, 8
      %p135 = por %p133, %p134
      %p136 = scmp.ne.s32.totalorder %s128, %s131
      %p137 = scmp.eq.s32.totalorder %s17, 0
      %p138 = por %p136, %p137
      %p139 = scmp.ne.s32.totalorder %s128, %s131
      %p140 = scmp.eq.s32.totalorder %s22, 8
      %p141 = por %p139, %p140
      %p142 = scmp.ne.s32.totalorder %s131, %s132
      %p143 = scmp.eq.s32.totalorder %s22, 0
      %p144 = por %p142, %p143
      %p145 = scmp.ne.s32.totalorder %s131, %s132
      %p146 = scmp.eq.s32.totalorder %s23, 8
      %p147 = por %p145, %p146
      %p149 = scmp.ne.s32.totalorder %s132, %s148
      %p150 = scmp.eq.s32.totalorder %s23, 0
      %p151 = por %p149, %p150
      %s152 = ssub.s32 %s24, %s43
      %s153 = ssub.s32 %s25, %s39
      %s154 = sor.u32 %s152, %s153
      %p155 = scmp.eq.s32.totalorder %s154, 0
      %s157 = sadd.s32 %s156, 1
      %s158 = scalar_select %p155, %s156, %s157
      %p161 = pneg %p155
      %p162 = scmp.eq.s32.totalorder %s17, 8
      %p163 = por %p161, %p162
      %p164 = scmp.ne.s32.totalorder %s156, %s159
      %p165 = scmp.eq.s32.totalorder %s17, 0
      %p166 = por %p164, %p165
      %p167 = scmp.ne.s32.totalorder %s156, %s159
      %p168 = scmp.eq.s32.totalorder %s22, 8
      %p169 = por %p167, %p168
      %p170 = scmp.ne.s32.totalorder %s159, %s160
      %p171 = scmp.eq.s32.totalorder %s22, 0
      %p172 = por %p170, %p171
      %p173 = scmp.ne.s32.totalorder %s159, %s160
      %p174 = scmp.eq.s32.totalorder %s23, 8
      %p175 = por %p173, %p174
      %p177 = scmp.ne.s32.totalorder %s160, %s176
      %p178 = scmp.eq.s32.totalorder %s23, 0
      %p179 = por %p177, %p178
      %p180 = scmp.le.s32.totalorder 1, %s17
      %p181 = scmp.lt.s32.totalorder %s17, 10
      %p182 = pnand %p180, %p181
      %p183 = pneg %p182
      // Predicated region
      $region9: #{tpu_custom_call.1} parent=5 // pred_check
        _
      $region10: #{tpu_custom_call.1} parent=5 // pred_check_branch
        %185 = sbr.rel (%p182) target = $region12
      $region11: #{tpu_custom_call.1} parent=5 // pred_region
        %s186 = ssub.s32 %s17, 1
        // Predicated region
        $region13: #{tpu_custom_call.1} parent=11 // pred_check
          %p187 = pneg %p118
        $region14: #{tpu_custom_call.1} parent=11 // pred_check_branch
          %189 = sbr.rel (%p187) target = $region16
        $region15: #{tpu_custom_call.1} parent=11 // pred_region
          %p190 = scmp.lt.s32.totalorder %s28, 0
          %s191 = scalar_select %p190, %s28, 0
          %s192 = scalar_lea.vmem %s2, %s191
        $region16: #{tpu_custom_call.1} parent=11 // pred_fallthru
          _
        // Predicated region
        $region17: #{tpu_custom_call.1} parent=11 // pred_check
          %p193 = pneg %p144
        $region18: #{tpu_custom_call.1} parent=11 // pred_check_branch
          %195 = sbr.rel (%p193) target = $region20
        $region19: #{tpu_custom_call.1} parent=11 // pred_region
          %p196 = scmp.lt.s32.totalorder %s28, 0
          %s197 = scalar_select %p196, %s28, 0
          %s198 = scalar_lea.vmem %s3, %s197
        $region20: #{tpu_custom_call.1} parent=11 // pred_fallthru
          _
      $region12: #{tpu_custom_call.1} parent=5 // pred_fallthru
        _
      %p199 = scmp.lt.s32.totalorder %s17, 9
      // Predicated region
      $region21: #{tpu_custom_call.1} parent=5 // pred_check
        %p200 = pneg %p199
      $region22: #{tpu_custom_call.1} parent=5 // pred_check_branch
        %202 = sbr.rel (%p200) target = $region24
      $region23: #{tpu_custom_call.1} parent=5 // pred_region
        // Predicated region
        $region25: #{tpu_custom_call.1} parent=23 // pred_check
          %p203 = pneg %p58
        $region26: #{tpu_custom_call.1} parent=23 // pred_check_branch
          %205 = sbr.rel (%p203) target = $region28
        $region27: #{tpu_custom_call.1} parent=23 // pred_region
          %s206 = sand.u32 %s48, 1
          %s207 = scalar_lea.sflag [#allocation4], %s206
          %s208 = sand.u32 %s48, 1
          %s209 = smul.addr %s208, 64
          %s210 = scalar_lea.vmem [#allocation3], %s209
          %s211 = smul.u32 16, %s24
          %s213 = ssub.s32 1024, 1024
          %214 = vsyncadd %s207, %s213
          %s215 = smul.addr %s26, 16
          %s216 = sadd.s32 %s211, %s215
          %s217 = smul.addr %s216, 64
          %s218 = scalar_lea.hbm %s0, %s217
          %s219 = sshll.u32 %s210, 4
          %s220 = int_to_ptr.vmem [resolvable:$true] %s219
          %225 = dma.hbm_to_vmem [thread:$0]  %s218, 1024, %s220, %s207, 64, 64, 4
        $region28: #{tpu_custom_call.1} parent=23 // pred_fallthru
          _
        // Predicated region
        $region29: #{tpu_custom_call.1} parent=23 // pred_check
          %p226 = pneg %p86
        $region30: #{tpu_custom_call.1} parent=23 // pred_check_branch
          %228 = sbr.rel (%p226) target = $region32
        $region31: #{tpu_custom_call.1} parent=23 // pred_region
          %s229 = sand.u32 %s76, 1
          %s230 = scalar_lea.sflag [#allocation7], %s229
          %s231 = sand.u32 %s76, 1
          %s232 = smul.addr %s231, 64
          %s233 = scalar_lea.vmem [#allocation6], %s232
          %s235 = ssub.s32 1024, 1024
          %236 = vsyncadd %s230, %s235
          %s237 = smul.addr %s26, 16
          %s238 = sadd.s32 %s25, %s237
          %s239 = smul.addr %s238, 64
          %s240 = scalar_lea.hbm %s1, %s239
          %s241 = sshll.u32 %s233, 4
          %s242 = int_to_ptr.vmem [resolvable:$true] %s241
          %247 = dma.hbm_to_vmem [thread:$0]  %s240, 1024, %s242, %s230, 64, 64, 4
        $region32: #{tpu_custom_call.1} parent=23 // pred_fallthru
          _
      $region24: #{tpu_custom_call.1} parent=5 // pred_fallthru
        _
      %p248 = scmp.le.s32.totalorder 1, %s17
      %p249 = scmp.lt.s32.totalorder %s17, 10
      %p250 = pnand %p248, %p249
      %p251 = pneg %p250
      // Predicated region
      $region33: #{tpu_custom_call.1} parent=5 // pred_check
        _
      $region34: #{tpu_custom_call.1} parent=5 // pred_check_branch
        %253 = sbr.rel (%p250) target = $region36
      $region35: #{tpu_custom_call.1} parent=5 // pred_region
        %s254 = ssub.s32 %s17, 1
        %s255 = sand.u32 %s51, 1
        %s256 = scalar_lea.sflag [#allocation4], %s255
        %s257 = sand.u32 %s51, 1
        %s258 = smul.addr %s257, 64
        %s259 = scalar_lea.vmem [#allocation3], %s258
        // Predicated region
        $region37: #{tpu_custom_call.1} parent=35 // pred_check
          %p260 = pneg %p64
        $region38: #{tpu_custom_call.1} parent=35 // pred_check_branch
          %262 = sbr.rel (%p260) target = $region40
        $region39: #{tpu_custom_call.1} parent=35 // pred_region
          %263 = dma.done %s256, 1024
        $region40: #{tpu_custom_call.1} parent=35 // pred_fallthru
          _
        %s264 = sand.u32 %s79, 1
        %s265 = scalar_lea.sflag [#allocation7], %s264
        %s266 = sand.u32 %s79, 1
        %s267 = smul.addr %s266, 64
        %s268 = scalar_lea.vmem [#allocation6], %s267
        // Predicated region
        $region41: #{tpu_custom_call.1} parent=35 // pred_check
          %p269 = pneg %p92
        $region42: #{tpu_custom_call.1} parent=35 // pred_check_branch
          %271 = sbr.rel (%p269) target = $region44
        $region43: #{tpu_custom_call.1} parent=35 // pred_region
          %272 = dma.done %s265, 1024
        $region44: #{tpu_custom_call.1} parent=35 // pred_fallthru
          _
        %s273 = sand.u32 %s51, 1
        %s274 = scalar_lea.sflag [#allocation4], %s273
        %s275 = sand.u32 %s51, 1
        %s276 = smul.addr %s275, 64
        %s277 = scalar_lea.vmem [#allocation3], %s276
        %p278 = pneg %p64
        %p279 = pneg %p61
        %s280 = sand.u32 %s79, 1
        %s281 = scalar_lea.sflag [#allocation7], %s280
        %s282 = sand.u32 %s79, 1
        %s283 = smul.addr %s282, 64
        %s284 = scalar_lea.vmem [#allocation6], %s283
        %p285 = pneg %p92
        %p286 = pneg %p89
        %p287 = scmp.lt.s32.totalorder %s28, 0
        %s288 = scalar_select %p287, %s28, 0
        %s289 = scalar_lea.vmem %s2, %s288
        %p290 = pneg %p118
        %p291 = pneg %p115
        %p292 = scmp.lt.s32.totalorder %s28, 0
        %s293 = scalar_select %p292, %s28, 0
        %s294 = scalar_lea.vmem %s3, %s293
        %p295 = pneg %p144
        %p296 = pneg %p141
        %p297 = pneg %p172
        %p298 = pneg %p169
        %s299 = smul.u32 16, %s27
        %p300 = scmp.lt.s32.totalorder %s28, 0
        %s301 = scalar_select %p300, %s28, 0
        %s302 = scalar_lea.vmem %s2, %s301
        %p303 = scmp.lt.s32.totalorder %s28, 0
        %s304 = scalar_select %p303, %s28, 0
        %s305 = scalar_lea.vmem %s3, %s304
        %s306 = smul.u32 16, %s27
        %p308 = scmp.eq.s32.totalorder %s29, 0
        // Predicated region
        $region45: #{tpu_custom_call.1} parent=35 // pred_check
          %p309 = pneg %p308
        $region46: #{tpu_custom_call.1} parent=35 // pred_check_branch
          %311 = sbr.rel (%p309) target = $region48
        $region47: #{tpu_custom_call.1} parent=35 // pred_region
          %312 = vst [vmem:[#allocation2] sm:$0xff] 0.0
          %313 = vst [vmem:[#allocation2 + $0x8] sm:$0xff] 0.0
          %314 = vst [vmem:[#allocation2 + $0x10] sm:$0xff] 0.0
          %315 = vst [vmem:[#allocation2 + $0x18] sm:$0xff] 0.0
          %316 = vst [vmem:[#allocation2 + $0x20] sm:$0xff] 0.0
          %317 = vst [vmem:[#allocation2 + $0x28] sm:$0xff] 0.0
          %318 = vst [vmem:[#allocation2 + $0x30] sm:$0xff] 0.0
          %319 = vst [vmem:[#allocation2 + $0x38] sm:$0xff] 0.0
          %320 = vst [vmem:[#allocation2 + $0x40] sm:$0xff] 0.0
          %321 = vst [vmem:[#allocation2 + $0x48] sm:$0xff] 0.0
          %322 = vst [vmem:[#allocation2 + $0x50] sm:$0xff] 0.0
          %323 = vst [vmem:[#allocation2 + $0x58] sm:$0xff] 0.0
          %324 = vst [vmem:[#allocation2 + $0x60] sm:$0xff] 0.0
          %325 = vst [vmem:[#allocation2 + $0x68] sm:$0xff] 0.0
          %326 = vst [vmem:[#allocation2 + $0x70] sm:$0xff] 0.0
          %327 = vst [vmem:[#allocation2 + $0x78] sm:$0xff] 0.0
        $region48: #{tpu_custom_call.1} parent=35 // pred_fallthru
          _
        %v328 = vld [vmem:[#allocation2] sm:$0xff]
        %v329 = vld [vmem:[#allocation2 + $0x8] sm:$0xff]
        %v330 = vld [vmem:[#allocation2 + $0x10] sm:$0xff]
        %v331 = vld [vmem:[#allocation2 + $0x18] sm:$0xff]
        %v332 = vld [vmem:[#allocation2 + $0x20] sm:$0xff]
        %v333 = vld [vmem:[#allocation2 + $0x28] sm:$0xff]
        %v334 = vld [vmem:[#allocation2 + $0x30] sm:$0xff]
        %v335 = vld [vmem:[#allocation2 + $0x38] sm:$0xff]
        %v336 = vld [vmem:[#allocation2 + $0x40] sm:$0xff]
        %v337 = vld [vmem:[#allocation2 + $0x48] sm:$0xff]
        %v338 = vld [vmem:[#allocation2 + $0x50] sm:$0xff]
        %v339 = vld [vmem:[#allocation2 + $0x58] sm:$0xff]
        %v340 = vld [vmem:[#allocation2 + $0x60] sm:$0xff]
        %v341 = vld [vmem:[#allocation2 + $0x68] sm:$0xff]
        %v342 = vld [vmem:[#allocation2 + $0x70] sm:$0xff]
        %v343 = vld [vmem:[#allocation2 + $0x78] sm:$0xff]
        %v344 = vld [vmem:[%s259] sm:$0xf]
        %v345 = vld [vmem:[%s259 + $0x4] sm:$0xf]
        %v346 = vld [vmem:[%s259 + $0x8] sm:$0xf]
        %v347 = vld [vmem:[%s259 + $0xc] sm:$0xf]
        %v348 = vld [vmem:[%s259 + $0x10] sm:$0xf]
        %v349 = vld [vmem:[%s259 + $0x14] sm:$0xf]
        %v350 = vld [vmem:[%s259 + $0x18] sm:$0xf]
        %v351 = vld [vmem:[%s259 + $0x1c] sm:$0xf]
        %v352 = vld [vmem:[%s259 + $0x20] sm:$0xf]
        %v353 = vld [vmem:[%s259 + $0x24] sm:$0xf]
        %v354 = vld [vmem:[%s259 + $0x28] sm:$0xf]
        %v355 = vld [vmem:[%s259 + $0x2c] sm:$0xf]
        %v356 = vld [vmem:[%s259 + $0x30] sm:$0xf]
        %v357 = vld [vmem:[%s259 + $0x34] sm:$0xf]
        %v358 = vld [vmem:[%s259 + $0x38] sm:$0xf]
        %v359 = vld [vmem:[%s259 + $0x3c] sm:$0xf]
        %v360 = vld [vmem:[%s268] sm:$0xf]
        %v361 = vld [vmem:[%s268 + $0x4] sm:$0xf]
        %v362 = vld [vmem:[%s268 + $0x8] sm:$0xf]
        %v363 = vld [vmem:[%s268 + $0xc] sm:$0xf]
        %v364 = vld [vmem:[%s268 + $0x10] sm:$0xf]
        %v365 = vld [vmem:[%s268 + $0x14] sm:$0xf]
        %v366 = vld [vmem:[%s268 + $0x18] sm:$0xf]
        %v367 = vld [vmem:[%s268 + $0x1c] sm:$0xf]
        %v368 = vld [vmem:[%s268 + $0x20] sm:$0xf]
        %v369 = vld [vmem:[%s268 + $0x24] sm:$0xf]
        %v370 = vld [vmem:[%s268 + $0x28] sm:$0xf]
        %v371 = vld [vmem:[%s268 + $0x2c] sm:$0xf]
        %v372 = vld [vmem:[%s268 + $0x30] sm:$0xf]
        %v373 = vld [vmem:[%s268 + $0x34] sm:$0xf]
        %v374 = vld [vmem:[%s268 + $0x38] sm:$0xf]
        %v375 = vld [vmem:[%s268 + $0x3c] sm:$0xf]
        %v392 = vunpack.c.l.b16 %v344
        %v393 = vunpack.c.l.b16 %v345
        %v394 = vunpack.c.l.b16 %v346
        %v395 = vunpack.c.l.b16 %v347
        %v396 = vunpack.c.l.b16 %v348
        %v397 = vunpack.c.l.b16 %v349
        %v398 = vunpack.c.l.b16 %v350
        %v399 = vunpack.c.l.b16 %v351
        %v400 = vunpack.c.l.b16 %v352
        %v401 = vunpack.c.l.b16 %v353
        %v402 = vunpack.c.l.b16 %v354
        %v403 = vunpack.c.l.b16 %v355
        %v404 = vunpack.c.l.b16 %v356
        %v405 = vunpack.c.l.b16 %v357
        %v406 = vunpack.c.l.b16 %v358
        %v407 = vunpack.c.l.b16 %v359
        %v408 = vpack.c.b16 %v393, %v392
        %v409 = vpack.c.b16 %v395, %v394
        %v410 = vpack.c.b16 %v397, %v396
        %v411 = vpack.c.b16 %v399, %v398
        %v412 = vpack.c.b16 %v401, %v400
        %v413 = vpack.c.b16 %v403, %v402
        %v414 = vpack.c.b16 %v405, %v404
        %v415 = vpack.c.b16 %v407, %v406
        %v440 = vunpack.c.l.b16 %v360
        %v441 = vunpack.c.l.b16 %v361
        %v442 = vunpack.c.l.b16 %v362
        %v443 = vunpack.c.l.b16 %v363
        %v444 = vunpack.c.l.b16 %v364
        %v445 = vunpack.c.l.b16 %v365
        %v446 = vunpack.c.l.b16 %v366
        %v447 = vunpack.c.l.b16 %v367
        %v448 = vunpack.c.l.b16 %v368
        %v449 = vunpack.c.l.b16 %v369
        %v450 = vunpack.c.l.b16 %v370
        %v451 = vunpack.c.l.b16 %v371
        %v452 = vunpack.c.l.b16 %v372
        %v453 = vunpack.c.l.b16 %v373
        %v454 = vunpack.c.l.b16 %v374
        %v455 = vunpack.c.l.b16 %v375
        %v456 = vpack.c.b16 %v441, %v440
        %v457 = vpack.c.b16 %v443, %v442
        %v458 = vpack.c.b16 %v445, %v444
        %v459 = vpack.c.b16 %v447, %v446
        %v460 = vpack.c.b16 %v449, %v448
        %v461 = vpack.c.b16 %v451, %v450
        %v462 = vpack.c.b16 %v453, %v452
        %v463 = vpack.c.b16 %v455, %v454
        %472 = vmatprep.subr.bf16.mxu0 0
        %473 = vmatpush1.bf16.msra.mxu0 %v463
        %474 = vmatprep.subr.bf16.mxu0 0
        %475 = vmatpush1.bf16.msra.mxu0 %v462
        %476 = vmatprep.subr.bf16.mxu0 0
        %477 = vmatpush1.bf16.msra.mxu0 %v461
        %478 = vmatprep.subr.bf16.mxu0 0
        %479 = vmatpush1.bf16.msra.mxu0 %v460
        %480 = vmatprep.subr.bf16.mxu0 0
        %481 = vmatpush1.bf16.msra.mxu0 %v459
        %482 = vmatprep.subr.bf16.mxu0 0
        %483 = vmatpush1.bf16.msra.mxu0 %v458
        %484 = vmatprep.subr.bf16.mxu0 0
        %485 = vmatpush1.bf16.msra.mxu0 %v457
        %486 = vmatprep.subr.bf16.mxu0 0
        %487 = vmatpush1.bf16.msra.mxu0 %v456
        %488 = vmatprep.subr.bf16.mxu0 0
        %489 = vmatpush2.bf16.msra.mxu0 0
        %490 = vmatprep.subr.bf16.mxu0 0
        %491 = vmatpush2.bf16.msra.mxu0 0
        %492 = vmatprep.subr.bf16.mxu0 0
        %493 = vmatpush2.bf16.msra.mxu0 0
        %494 = vmatprep.subr.bf16.mxu0 0
        %495 = vmatpush2.bf16.msra.mxu0 0
        %496 = vmatprep.subr.bf16.mxu0 0
        %497 = vmatpush2.bf16.msra.mxu0 0
        %498 = vmatprep.subr.bf16.mxu0 0
        %499 = vmatpush2.bf16.msra.mxu0 0
        %500 = vmatprep.subr.bf16.mxu0 0
        %501 = vmatpush2.bf16.msra.mxu0 0
        %502 = vmatprep.subr.bf16.mxu0 0
        %503 = vmatpush2.bf16.msra.mxu0 0
        %504 = vmatprep.mubr.bf16.mxu0 0
        %505 = vmatmul.mubr.bf16.gmra.mxu0 %v408
        %v506 = vpop.f32.mrf.mxu0
        %v507 = vadd.f32 0.0, %v506
        %v508 = vpop.f32.mrf.mxu0
        %v509 = vpop.f32.mrf.mxu0
        %v510 = vadd.f32 0.0, %v509
        %v511 = vpop.f32.mrf.mxu0
        %512 = vmatprep.mubr.bf16.mxu0 0
        %513 = vmatmul.mubr.bf16.gmra.mxu0 %v409
        %v514 = vpop.f32.mrf.mxu0
        %v515 = vadd.f32 0.0, %v514
        %v516 = vpop.f32.mrf.mxu0
        %v517 = vpop.f32.mrf.mxu0
        %v518 = vadd.f32 0.0, %v517
        %v519 = vpop.f32.mrf.mxu0
        %520 = vmatprep.mubr.bf16.mxu0 0
        %521 = vmatmul.mubr.bf16.gmra.mxu0 %v410
        %v522 = vpop.f32.mrf.mxu0
        %v523 = vadd.f32 0.0, %v522
        %v524 = vpop.f32.mrf.mxu0
        %v525 = vpop.f32.mrf.mxu0
        %v526 = vadd.f32 0.0, %v525
        %v527 = vpop.f32.mrf.mxu0
        %528 = vmatprep.mubr.bf16.mxu0 0
        %529 = vmatmul.mubr.bf16.gmra.mxu0 %v411
        %v530 = vpop.f32.mrf.mxu0
        %v531 = vadd.f32 0.0, %v530
        %v532 = vpop.f32.mrf.mxu0
        %v533 = vpop.f32.mrf.mxu0
        %v534 = vadd.f32 0.0, %v533
        %v535 = vpop.f32.mrf.mxu0
        %536 = vmatprep.mubr.bf16.mxu0 0
        %537 = vmatmul.mubr.bf16.gmra.mxu0 %v412
        %v538 = vpop.f32.mrf.mxu0
        %v539 = vadd.f32 0.0, %v538
        %v540 = vpop.f32.mrf.mxu0
        %v541 = vpop.f32.mrf.mxu0
        %v542 = vadd.f32 0.0, %v541
        %v543 = vpop.f32.mrf.mxu0
        %544 = vmatprep.mubr.bf16.mxu0 0
        %545 = vmatmul.mubr.bf16.gmra.mxu0 %v413
        %v546 = vpop.f32.mrf.mxu0
        %v547 = vadd.f32 0.0, %v546
        %v548 = vpop.f32.mrf.mxu0
        %v549 = vpop.f32.mrf.mxu0
        %v550 = vadd.f32 0.0, %v549
        %v551 = vpop.f32.mrf.mxu0
        %552 = vmatprep.mubr.bf16.mxu0 0
        %553 = vmatmul.mubr.bf16.gmra.mxu0 %v414
        %v554 = vpop.f32.mrf.mxu0
        %v555 = vadd.f32 0.0, %v554
        %v556 = vpop.f32.mrf.mxu0
        %v557 = vpop.f32.mrf.mxu0
        %v558 = vadd.f32 0.0, %v557
        %v559 = vpop.f32.mrf.mxu0
        %560 = vmatprep.mubr.bf16.mxu0 0
        %561 = vmatmul.mubr.bf16.gmra.mxu0 %v415
        %v562 = vpop.f32.mrf.mxu0
        %v563 = vadd.f32 0.0, %v562
        %v564 = vpop.f32.mrf.mxu0
        %v565 = vpop.f32.mrf.mxu0
        %v566 = vadd.f32 0.0, %v565
        %v567 = vpop.f32.mrf.mxu0
        %568 = vdwg.mxu0
        %v569 = vadd.f32 %v328, %v507
        %v570 = vadd.f32 %v329, %v510
        %v571 = vadd.f32 %v330, %v515
        %v572 = vadd.f32 %v331, %v518
        %v573 = vadd.f32 %v332, %v523
        %v574 = vadd.f32 %v333, %v526
        %v575 = vadd.f32 %v334, %v531
        %v576 = vadd.f32 %v335, %v534
        %v577 = vadd.f32 %v336, %v539
        %v578 = vadd.f32 %v337, %v542
        %v579 = vadd.f32 %v338, %v547
        %v580 = vadd.f32 %v339, %v550
        %v581 = vadd.f32 %v340, %v555
        %v582 = vadd.f32 %v341, %v558
        %v583 = vadd.f32 %v342, %v563
        %v584 = vadd.f32 %v343, %v566
        %585 = vst [vmem:[#allocation2] sm:$0xff] %v569
        %586 = vst [vmem:[#allocation2 + $0x8] sm:$0xff] %v570
        %587 = vst [vmem:[#allocation2 + $0x10] sm:$0xff] %v571
        %588 = vst [vmem:[#allocation2 + $0x18] sm:$0xff] %v572
        %589 = vst [vmem:[#allocation2 + $0x20] sm:$0xff] %v573
        %590 = vst [vmem:[#allocation2 + $0x28] sm:$0xff] %v574
        %591 = vst [vmem:[#allocation2 + $0x30] sm:$0xff] %v575
        %592 = vst [vmem:[#allocation2 + $0x38] sm:$0xff] %v576
        %593 = vst [vmem:[#allocation2 + $0x40] sm:$0xff] %v577
        %594 = vst [vmem:[#allocation2 + $0x48] sm:$0xff] %v578
        %595 = vst [vmem:[#allocation2 + $0x50] sm:$0xff] %v579
        %596 = vst [vmem:[#allocation2 + $0x58] sm:$0xff] %v580
        %597 = vst [vmem:[#allocation2 + $0x60] sm:$0xff] %v581
        %598 = vst [vmem:[#allocation2 + $0x68] sm:$0xff] %v582
        %599 = vst [vmem:[#allocation2 + $0x70] sm:$0xff] %v583
        %600 = vst [vmem:[#allocation2 + $0x78] sm:$0xff] %v584
        %p601 = scmp.eq.s32.totalorder %s29, 8
        // Predicated region
        $region49: #{tpu_custom_call.1} parent=35 // pred_check
          %p602 = pneg %p601
        $region50: #{tpu_custom_call.1} parent=35 // pred_check_branch
          %604 = sbr.rel (%p602) target = $region52
        $region51: #{tpu_custom_call.1} parent=35 // pred_region
          %v605 = vld [vmem:[#allocation2] sm:$0xff]
          %v606 = vld [vmem:[#allocation2 + $0x8] sm:$0xff]
          %v607 = vld [vmem:[#allocation2 + $0x10] sm:$0xff]
          %v608 = vld [vmem:[#allocation2 + $0x18] sm:$0xff]
          %v609 = vld [vmem:[#allocation2 + $0x20] sm:$0xff]
          %v610 = vld [vmem:[#allocation2 + $0x28] sm:$0xff]
          %v611 = vld [vmem:[#allocation2 + $0x30] sm:$0xff]
          %v612 = vld [vmem:[#allocation2 + $0x38] sm:$0xff]
          %v613 = vld [vmem:[#allocation2 + $0x40] sm:$0xff]
          %v614 = vld [vmem:[#allocation2 + $0x48] sm:$0xff]
          %v615 = vld [vmem:[#allocation2 + $0x50] sm:$0xff]
          %v616 = vld [vmem:[#allocation2 + $0x58] sm:$0xff]
          %v617 = vld [vmem:[#allocation2 + $0x60] sm:$0xff]
          %v618 = vld [vmem:[#allocation2 + $0x68] sm:$0xff]
          %v619 = vld [vmem:[#allocation2 + $0x70] sm:$0xff]
          %v620 = vld [vmem:[#allocation2 + $0x78] sm:$0xff]
          %v621 = vld [vmem:[%s302] sm:$0x1]
          %v623 = vlaneseq
          %v624 = vshrl.u32 %v623, 7
          %v625 = vsub.s32 0, %v624
          %v626 = vrot.slane %v621, %v625
          %v628 = vmul.f32 %v605, %v626
          %v629 = vmul.f32 %v606, %v626
          %v630 = vmul.f32 %v607, %v626
          %v631 = vmul.f32 %v608, %v626
          %v632 = vmul.f32 %v609, %v626
          %v633 = vmul.f32 %v610, %v626
          %v634 = vmul.f32 %v611, %v626
          %v635 = vmul.f32 %v612, %v626
          %v636 = vmul.f32 %v613, %v626
          %v637 = vmul.f32 %v614, %v626
          %v638 = vmul.f32 %v615, %v626
          %v639 = vmul.f32 %v616, %v626
          %v640 = vmul.f32 %v617, %v626
          %v641 = vmul.f32 %v618, %v626
          %v642 = vmul.f32 %v619, %v626
          %v643 = vmul.f32 %v620, %v626
          %v644 = vld [vmem:[%s305] sm:$0x1]
          %v646 = vlaneseq
          %v647 = vshrl.u32 %v646, 7
          %v648 = vsub.s32 0, %v647
          %v649 = vrot.slane %v644, %v648
          %v651 = vadd.f32 %v628, %v649
          %v652 = vadd.f32 %v629, %v649
          %v653 = vadd.f32 %v630, %v649
          %v654 = vadd.f32 %v631, %v649
          %v655 = vadd.f32 %v632, %v649
          %v656 = vadd.f32 %v633, %v649
          %v657 = vadd.f32 %v634, %v649
          %v658 = vadd.f32 %v635, %v649
          %v659 = vadd.f32 %v636, %v649
          %v660 = vadd.f32 %v637, %v649
          %v661 = vadd.f32 %v638, %v649
          %v662 = vadd.f32 %v639, %v649
          %v663 = vadd.f32 %v640, %v649
          %v664 = vadd.f32 %v641, %v649
          %v665 = vadd.f32 %v642, %v649
          %v666 = vadd.f32 %v643, %v649
          %v667 = vmax.f32 %v651, 0.0
          %v668 = vmax.f32 %v652, 0.0
          %v669 = vmax.f32 %v653, 0.0
          %v670 = vmax.f32 %v654, 0.0
          %v671 = vmax.f32 %v655, 0.0
          %v672 = vmax.f32 %v656, 0.0
          %v673 = vmax.f32 %v657, 0.0
          %v674 = vmax.f32 %v658, 0.0
          %v675 = vmax.f32 %v659, 0.0
          %v676 = vmax.f32 %v660, 0.0
          %v677 = vmax.f32 %v661, 0.0
          %v678 = vmax.f32 %v662, 0.0
          %v679 = vmax.f32 %v663, 0.0
          %v680 = vmax.f32 %v664, 0.0
          %v681 = vmax.f32 %v665, 0.0
          %v682 = vmax.f32 %v666, 0.0
          %683 = vst [vmem:[#allocation8] sm:$0xff] %v667
          %684 = vst [vmem:[#allocation8 + $0x8] sm:$0xff] %v668
          %685 = vst [vmem:[#allocation8 + $0x10] sm:$0xff] %v669
          %686 = vst [vmem:[#allocation8 + $0x18] sm:$0xff] %v670
          %687 = vst [vmem:[#allocation8 + $0x20] sm:$0xff] %v671
          %688 = vst [vmem:[#allocation8 + $0x28] sm:$0xff] %v672
          %689 = vst [vmem:[#allocation8 + $0x30] sm:$0xff] %v673
          %690 = vst [vmem:[#allocation8 + $0x38] sm:$0xff] %v674
          %691 = vst [vmem:[#allocation8 + $0x40] sm:$0xff] %v675
          %692 = vst [vmem:[#allocation8 + $0x48] sm:$0xff] %v676
          %693 = vst [vmem:[#allocation8 + $0x50] sm:$0xff] %v677
          %694 = vst [vmem:[#allocation8 + $0x58] sm:$0xff] %v678
          %695 = vst [vmem:[#allocation8 + $0x60] sm:$0xff] %v679
          %696 = vst [vmem:[#allocation8 + $0x68] sm:$0xff] %v680
          %697 = vst [vmem:[#allocation8 + $0x70] sm:$0xff] %v681
          %698 = vst [vmem:[#allocation8 + $0x78] sm:$0xff] %v682
        $region52: #{tpu_custom_call.1} parent=35 // pred_fallthru
          _
        // Predicated region
        $region53: #{tpu_custom_call.1} parent=35 // pred_check
          %p699 = pneg %p169
        $region54: #{tpu_custom_call.1} parent=35 // pred_check_branch
          %701 = sbr.rel (%p699) target = $region56
        $region55: #{tpu_custom_call.1} parent=35 // pred_region
          %s702 = smul.u32 16, %s27
          %s704 = ssub.s32 2048, 2048
          %705 = vsyncadd [#allocation5], %s704
          %s706 = sadd.s32 %s28, %s702
          %s707 = smul.addr %s706, 128
          %s708 = scalar_lea.hbm %s4, %s707
          %s709 = sshll.u32 [#allocation8], 4
          %s710 = int_to_ptr.vmem [resolvable:$true] %s709
          %715 = dma.vmem_to_hbm [thread:$0]  %s710, 2048, %s708, [#allocation5], 128, 128, 8
        $region56: #{tpu_custom_call.1} parent=35 // pred_fallthru
          _
        // Predicated region
        $region57: #{tpu_custom_call.1} parent=35 // pred_check
          %p716 = pneg %p169
        $region58: #{tpu_custom_call.1} parent=35 // pred_check_branch
          %718 = sbr.rel (%p716) target = $region60
        $region59: #{tpu_custom_call.1} parent=35 // pred_region
          %719 = dma.done [#allocation5], 2048
        $region60: #{tpu_custom_call.1} parent=35 // pred_fallthru
          _
      $region36: #{tpu_custom_call.1} parent=5 // pred_fallthru
        _
      %p720 = scmp.le.s32.totalorder 2, %s17
      // Predicated region
      $region61: #{tpu_custom_call.1} parent=5 // pred_check
        %p721 = pneg %p720
      $region62: #{tpu_custom_call.1} parent=5 // pred_check_branch
        %723 = sbr.rel (%p721) target = $region64
      $region63: #{tpu_custom_call.1} parent=5 // pred_region
        %s724 = ssub.s32 %s17, 2
      $region64: #{tpu_custom_call.1} parent=5 // pred_fallthru
        _
    $region6: #{tpu_custom_call.1} parent=1 // loop_footer
      %s21 = sadd.s32 1, %s17
    $region7: #{tpu_custom_call.1} parent=1 // loop_footer_branch
      %16 = sbr.rel target = $region3
    $region8: #{tpu_custom_call.1} parent=1 // loop_exit
      _
    %725 = vsyncpa [#allocation4], 1
    %s726 = scalar_lea.sflag [#allocation4], 1
    %727 = vsyncpa %s726, 1
    %728 = vsyncpa [#allocation7], 1
    %s729 = scalar_lea.sflag [#allocation7], 1
    %730 = vsyncpa %s729, 1
    %731 = vsyncpa [#allocation5], 1
    %s732 = scalar_lea.sflag [#allocation5], 1
    %733 = vsyncpa %s732, 1

</llo_original>
